<compile_context>
chip_gen: v6e
topology: v6e:2x2x1
jax: 0.10.0
libtpu: 0.0.40
codegen_flags: <defaults>
</compile_context>

<pallas_src>
import jax
import jax.numpy as jnp
from jax import lax
from jax.experimental import pallas as pl
from jax.experimental.pallas import tpu as pltpu


def _round_up(x, m):
    return ((x + m - 1) // m) * m


def embedding_net_kernel(x_ref, w1_ref, b1_ref, w2_ref, b2_ref, emb_ref, z_ref):
    # fc1 + ReLU.  Operands arrive already in the MXU dtype (bf16 or f32);
    # accumulation is always f32.
    h = jnp.dot(x_ref[...], w1_ref[...], preferred_element_type=jnp.float32)
    emb = jnp.maximum(h + b1_ref[...], 0.0)          # b1 is f32, broadcast (1, emb)
    emb_ref[...] = emb.astype(emb_ref.dtype)

    # fc2 + L2 normalize over features (F.normalize(..., dim=1), p=2, eps=1e-12).
    z = jnp.dot(emb.astype(w2_ref.dtype), w2_ref[...],
                preferred_element_type=jnp.float32)
    z = z + b2_ref[...]
    sumsq = jnp.sum(z * z, axis=1, keepdims=True)     # f32
    # rsqrt runs on the EUP (own VLIW slot); clamping sumsq at eps^2 is
    # identical to F.normalize's clamp_min(norm, eps).
    inv_norm = lax.rsqrt(jnp.maximum(sumsq, 1e-24))
    z_ref[...] = (z * inv_norm).astype(z_ref.dtype)


def embedding_net_forward(features, w1, b1, w2, b2, *,
                          block_b=2048, operand_dtype=jnp.bfloat16):
    """features: (B, resSize); w1: (resSize, embedSize); w2: (embedSize, outzSize).

    Weights are stored pre-transposed ((in, out)) relative to PyTorch Linear.
    operand_dtype controls the HBM/MXU operand precision (bf16 recommended on
    all generations; accumulation is always f32).  In a real model the weight
    casts below would be done once at init, not per forward call.
    """
    B, res = features.shape
    emb_size = w1.shape[1]
    outz_size = w2.shape[1]
    out_dtype = features.dtype

    # Batch tile: multiple of 8 sublanes, and capped so the grid has >= 2
    # steps whenever B allows (v7x megacore uses both TensorCores).
    block_b = max(8, min(int(block_b), _round_up(-(-B // 2), 8)))
    b_p = _round_up(B, block_b)

    # Cast operands to the MXU dtype once; only the batch axis is ever padded.
    x = features.astype(operand_dtype)
    if b_p != B:
        x = jnp.zeros((b_p, res), operand_dtype).at[:B].set(x)
    w1c = w1.astype(operand_dtype)
    w2c = w2.astype(operand_dtype)
    b1r = b1.reshape(1, emb_size).astype(jnp.float32)   # biases stay f32 (tiny)
    b2r = b2.reshape(1, outz_size).astype(jnp.float32)

    grid = (b_p // block_b,)

    op_bytes = jnp.dtype(operand_dtype).itemsize
    out_bytes = jnp.dtype(out_dtype).itemsize
    cost = pl.CostEstimate(
        flops=2 * b_p * (res * emb_size + emb_size * outz_size),
        transcendentals=b_p,  # one rsqrt per row
        bytes_accessed=(op_bytes * (b_p * res + res * emb_size + emb_size * outz_size)
                        + out_bytes * (b_p * emb_size + b_p * outz_size)),
    )

    emb_out, z_out = pl.pallas_call(
        embedding_net_kernel,
        out_shape=(
            jax.ShapeDtypeStruct((b_p, emb_size), out_dtype),
            jax.ShapeDtypeStruct((b_p, outz_size), out_dtype),
        ),
        grid=grid,
        in_specs=[
            pl.BlockSpec((block_b, res), lambda i: (i, 0)),        # x tile (pipelined)
            pl.BlockSpec((res, emb_size), lambda i: (0, 0)),       # w1 (VMEM resident)
            pl.BlockSpec((1, emb_size), lambda i: (0, 0)),         # b1 (resident)
            pl.BlockSpec((emb_size, outz_size), lambda i: (0, 0)), # w2 (resident)
            pl.BlockSpec((1, outz_size), lambda i: (0, 0)),        # b2 (resident)
        ],
        out_specs=(
            pl.BlockSpec((block_b, emb_size), lambda i: (i, 0)),
            pl.BlockSpec((block_b, outz_size), lambda i: (i, 0)),
        ),
        compiler_params=pltpu.CompilerParams(
            dimension_semantics=("parallel",),   # megacore split on v7x
            vmem_limit_bytes=32 << 20,           # raises v5e's 16 MiB scoped default
        ),
        cost_estimate=cost,
    )(x, w1c, b1r, w2c, b2r)

    if b_p != B:
        emb_out = emb_out[:B]
        z_out = z_out[:B]
    return emb_out, z_out


def _reference(features, w1, b1, w2, b2):
    emb = jnp.maximum(features @ w1 + b1, 0.0)
    z = emb @ w2 + b2
    norm = jnp.maximum(jnp.sqrt(jnp.sum(z * z, axis=1, keepdims=True)), 1e-12)
    return emb, z / norm


if __name__ == "__main__":
    # Small shapes consistent with the module: opt.resSize, opt.embedSize, opt.outzSize.
    B, RES, EMB, OUTZ = 8, 64, 32, 16

    key = jax.random.PRNGKey(0)
    k_x, k1, k2 = jax.random.split(key, 3)

    features = jax.random.normal(k_x, (B, RES), jnp.float32)
    # weights_init: Linear weight ~ N(0, 0.02), bias = 0.  Stored as (in, out).
    w1 = jax.random.normal(k1, (RES, EMB), jnp.float32) * 0.02
    b1 = jnp.zeros((EMB,), jnp.float32)
    w2 = jax.random.normal(k2, (EMB, OUTZ), jnp.float32) * 0.02
    b2 = jnp.zeros((OUTZ,), jnp.float32)

    emb_ref, z_ref = _reference(features, w1, b1, w2, b2)

    # Exact f32 operand path.
    emb_f32, z_f32 = embedding_net_forward(features, w1, b1, w2, b2,
                                           operand_dtype=jnp.float32)
    jax.block_until_ready((emb_f32, z_f32))
    assert emb_f32.shape == (B, EMB) and z_f32.shape == (B, OUTZ)
    assert jnp.allclose(emb_f32, emb_ref, atol=1e-5), "f32 embedding mismatch"
    assert jnp.allclose(z_f32, z_ref, atol=1e-5), "f32 out_z mismatch"

    # Default bf16-operand path (recommended: halves HBM traffic, f32 accumulate).
    emb_bf, z_bf = embedding_net_forward(features, w1, b1, w2, b2)
    jax.block_until_ready((emb_bf, z_bf))
    assert jnp.allclose(emb_bf, emb_ref, atol=2e-2), "bf16 embedding mismatch"
    assert jnp.allclose(z_bf, z_ref, atol=2e-2), "bf16 out_z mismatch"

    # Larger, non-divisible batch: exercises batch padding and a >=2-step grid.
    Bl = 1000
    feats_l = jax.random.normal(jax.random.PRNGKey(1), (Bl, RES), jnp.float32)
    emb_l, z_l = embedding_net_forward(feats_l, w1, b1, w2, b2)
    jax.block_until_ready((emb_l, z_l))
    emb_l_ref, z_l_ref = _reference(feats_l, w1, b1, w2, b2)
    assert emb_l.shape == (Bl, EMB) and z_l.shape == (Bl, OUTZ)
    assert jnp.allclose(emb_l, emb_l_ref, atol=2e-2), "large-batch embedding mismatch"
    assert jnp.allclose(z_l, z_l_ref, atol=2e-2), "large-batch out_z mismatch"

    print("KERNEL_OK")
</pallas_src>

<mosaic_0001>
module attributes {stable_mosaic.version = 11 : i64} {
  func.func @embedding_net_kernel(%arg0: i32, %arg1: memref<8x64xf32, #tpu.memory_space<vmem>>, %arg2: memref<64x32xf32, #tpu.memory_space<vmem>>, %arg3: memref<1x32xf32, #tpu.memory_space<vmem>>, %arg4: memref<32x16xf32, #tpu.memory_space<vmem>>, %arg5: memref<1x16xf32, #tpu.memory_space<vmem>>, %arg6: memref<8x32xf32, #tpu.memory_space<vmem>>, %arg7: memref<8x16xf32, #tpu.memory_space<vmem>>) attributes {dimension_semantics = [#tpu.dimension_semantics<parallel>], iteration_bounds = array<i64: 1>, scalar_prefetch = 0 : i64, scratch_operands = 0 : i64, tpu.core_type = #tpu.core_type<tc>, window_params = [{transform_indices = @transform_0, window_bounds = array<i64: 8, 64>}, {pipeline_mode = #tpu.pipeline_mode<synchronous>, transform_indices = @transform_1, window_bounds = array<i64: 64, 32>}, {pipeline_mode = #tpu.pipeline_mode<synchronous>, transform_indices = @transform_2, window_bounds = array<i64: 1, 32>}, {pipeline_mode = #tpu.pipeline_mode<synchronous>, transform_indices = @transform_3, window_bounds = array<i64: 32, 16>}, {pipeline_mode = #tpu.pipeline_mode<synchronous>, transform_indices = @transform_4, window_bounds = array<i64: 1, 16>}, {transform_indices = @transform_5, window_bounds = array<i64: 8, 32>}, {transform_indices = @transform_6, window_bounds = array<i64: 8, 16>}]} {
    %c0 = arith.constant 0 : index
    %c0_0 = arith.constant 0 : index
    %0 = vector.load %arg1[%c0, %c0_0] : memref<8x64xf32, #tpu.memory_space<vmem>>, vector<8x64xf32>
    %c0_1 = arith.constant 0 : index
    %c0_2 = arith.constant 0 : index
    %1 = vector.load %arg2[%c0_1, %c0_2] : memref<64x32xf32, #tpu.memory_space<vmem>>, vector<64x32xf32>
    %cst = arith.constant dense<0.000000e+00> : vector<8x32xf32>
    %2 = tpu.matmul %0, %1, %cst {dimension_numbers = #tpu.dot_dimension_numbers<[1], [0], [0], [1], [0, 0, 1, 1], [], []>} : vector<8x64xf32>, vector<64x32xf32>, vector<8x32xf32> -> vector<8x32xf32>
    %c0_3 = arith.constant 0 : index
    %c0_4 = arith.constant 0 : index
    %3 = vector.load %arg3[%c0_3, %c0_4] : memref<1x32xf32, #tpu.memory_space<vmem>>, vector<1x32xf32>
    %4 = vector.broadcast %3 : vector<1x32xf32> to vector<8x32xf32>
    %5 = arith.addf %2, %4 : vector<8x32xf32>
    %cst_5 = arith.constant 0.000000e+00 : f32
    %6 = vector.broadcast %cst_5 : f32 to vector<8x32xf32>
    %7 = arith.maximumf %5, %6 : vector<8x32xf32>
    %c0_6 = arith.constant 0 : index
    %c0_7 = arith.constant 0 : index
    %8 = vector.load %arg6[%c0_6, %c0_7] : memref<8x32xf32, #tpu.memory_space<vmem>>, vector<8x32xf32>
    tpu.vector_store %arg6[%c0_6, %c0_7], %7 {strides = array<i32>} : memref<8x32xf32, #tpu.memory_space<vmem>>, vector<8x32xf32>,
    %c0_8 = arith.constant 0 : index
    %c0_9 = arith.constant 0 : index
    %9 = vector.load %arg4[%c0_8, %c0_9] : memref<32x16xf32, #tpu.memory_space<vmem>>, vector<32x16xf32>
    %cst_10 = arith.constant dense<0.000000e+00> : vector<8x16xf32>
    %10 = tpu.matmul %7, %9, %cst_10 {dimension_numbers = #tpu.dot_dimension_numbers<[1], [0], [0], [1], [0, 0, 1, 1], [], []>} : vector<8x32xf32>, vector<32x16xf32>, vector<8x16xf32> -> vector<8x16xf32>
    %c0_11 = arith.constant 0 : index
    %c0_12 = arith.constant 0 : index
    %11 = vector.load %arg5[%c0_11, %c0_12] : memref<1x16xf32, #tpu.memory_space<vmem>>, vector<1x16xf32>
    %12 = vector.broadcast %11 : vector<1x16xf32> to vector<8x16xf32>
    %13 = arith.addf %10, %12 : vector<8x16xf32>
    %14 = arith.mulf %13, %13 : vector<8x16xf32>
    %cst_13 = arith.constant dense<0.000000e+00> : vector<8xf32>
    %15 = vector.multi_reduction <add>, %14, %cst_13 [1] : vector<8x16xf32> to vector<8xf32>
    %16 = vector.shape_cast %15 : vector<8xf32> to vector<8x1xf32>
    %cst_14 = arith.constant 1.000000e-24 : f32
    %17 = vector.broadcast %cst_14 : f32 to vector<8x1xf32>
    %18 = arith.maximumf %16, %17 : vector<8x1xf32>
    %19 = math.rsqrt %18 : vector<8x1xf32>
    %20 = vector.broadcast %19 : vector<8x1xf32> to vector<8x16xf32>
    %21 = arith.mulf %13, %20 : vector<8x16xf32>
    %c0_15 = arith.constant 0 : index
    %c0_16 = arith.constant 0 : index
    %22 = vector.load %arg7[%c0_15, %c0_16] : memref<8x16xf32, #tpu.memory_space<vmem>>, vector<8x16xf32>
    tpu.vector_store %arg7[%c0_15, %c0_16], %21 {strides = array<i32>} : memref<8x16xf32, #tpu.memory_space<vmem>>, vector<8x16xf32>,
    return
  }
  func.func @transform_0(%arg0: i32) -> (i32, i32) {
    %c0_i32 = arith.constant 0 : i32
    %c0_i32_0 = arith.constant 0 : i32
    return %arg0, %c0_i32 : i32, i32
  }
  func.func @transform_1(%arg0: i32) -> (i32, i32) {
    %c0_i32 = arith.constant 0 : i32
    %c0_i32_0 = arith.constant 0 : i32
    %c0_i32_1 = arith.constant 0 : i32
    return %c0_i32, %c0_i32_0 : i32, i32
  }
  func.func @transform_2(%arg0: i32) -> (i32, i32) {
    %c0_i32 = arith.constant 0 : i32
    %c0_i32_0 = arith.constant 0 : i32
    %c0_i32_1 = arith.constant 0 : i32
    return %c0_i32, %c0_i32_0 : i32, i32
  }
  func.func @transform_3(%arg0: i32) -> (i32, i32) {
    %c0_i32 = arith.constant 0 : i32
    %c0_i32_0 = arith.constant 0 : i32
    %c0_i32_1 = arith.constant 0 : i32
    return %c0_i32, %c0_i32_0 : i32, i32
  }
  func.func @transform_4(%arg0: i32) -> (i32, i32) {
    %c0_i32 = arith.constant 0 : i32
    %c0_i32_0 = arith.constant 0 : i32
    %c0_i32_1 = arith.constant 0 : i32
    return %c0_i32, %c0_i32_0 : i32, i32
  }
  func.func @transform_5(%arg0: i32) -> (i32, i32) {
    %c0_i32 = arith.constant 0 : i32
    %c0_i32_0 = arith.constant 0 : i32
    return %arg0, %c0_i32 : i32, i32
  }
  func.func @transform_6(%arg0: i32) -> (i32, i32) {
    %c0_i32 = arith.constant 0 : i32
    %c0_i32_0 = arith.constant 0 : i32
    return %arg0, %c0_i32 : i32, i32
  }
}

</mosaic_0001>

<llo_original>
// kernel: tpu_custom_call.1
$region0: #{tpu_custom_call.1}
  #allocation0 [shape = 'u32[]', space=smem, size = 0x4, offset = 0x4, fixed_abs, tag = 'smem constant byte address 0x4 - core index']
  #allocation1 [shape = 'u32[144,128]{1,0:T(1,128)}', space=vmem, size = 0x12000, scoped, tag = 'internal scratch']
  %s0 = inlined_call_operand.vmem [shape: f32[8,64], index: 0, kind: input, shape index: {}]
  %s1 = inlined_call_operand.vmem [shape: f32[64,32], index: 1, kind: input, shape index: {}]
  %s2 = inlined_call_operand.vmem [shape: f32[1,32], index: 2, kind: input, shape index: {}]
  %s3 = inlined_call_operand.vmem [shape: f32[32,16], index: 3, kind: input, shape index: {}]
  %s4 = inlined_call_operand.vmem [shape: f32[1,16], index: 4, kind: input, shape index: {}]
  %s5 = inlined_call_operand.hbm [shape: f32[8,32], index: 5, kind: output, shape index: {0}]
  %s6 = inlined_call_operand.hbm [shape: f32[8,16], index: 6, kind: output, shape index: {1}]
  %7 = xla_tuple %s5, %s6
  %s8 = sld [smem:[#allocation0]]
  $region38: #{tpu_custom_call.1} parent=0
    _
  %s10 = ssub.s32 1, %s8
  %s11 = scalar_select 0, %s10, %s8
  $region1: #{tpu_custom_call.1} parent=0
    #allocation2 [shape = 'u8[4096]{0}', space=vmem, size = 0x1000, scoped, tag = 'output window, operand 0, single buffered']
    #allocation3 [shape = 's32[1]{0}', space=sflag, size = 0x4, scoped, tag = 'scoped memory for tpu_custom_call.1']
    #allocation4 [shape = 'u8[4096]{0}', space=vmem, size = 0x1000, scoped, tag = 'output window, operand 1, single buffered']
    #allocation5 [shape = 's32[1]{0}', space=sflag, size = 0x4, scoped, tag = 'scoped memory for tpu_custom_call.1']
    %12 = vsyncpa [#allocation3], 0
    %13 = vsyncpa [#allocation5], 0
    // Predicated region
    $region2: #{tpu_custom_call.1} parent=1 // pred_check
      _
    $region3: #{tpu_custom_call.1} parent=1 // pred_check_branch
      %15 = sbr.rel (0) target = $region5
    $region4: #{tpu_custom_call.1} parent=1 // pred_region
      _
    $region5: #{tpu_custom_call.1} parent=1 // pred_fallthru
      _
    // Predicated region
    $region6: #{tpu_custom_call.1} parent=1 // pred_check
      _
    $region7: #{tpu_custom_call.1} parent=1 // pred_check_branch
      %17 = sbr.rel (0) target = $region9
    $region8: #{tpu_custom_call.1} parent=1 // pred_region
      _
    $region9: #{tpu_custom_call.1} parent=1 // pred_fallthru
      _
    // Predicated region
    $region10: #{tpu_custom_call.1} parent=1 // pred_check
      _
    $region11: #{tpu_custom_call.1} parent=1 // pred_check_branch
      %19 = sbr.rel (0) target = $region13
    $region12: #{tpu_custom_call.1} parent=1 // pred_region
      _
    $region13: #{tpu_custom_call.1} parent=1 // pred_fallthru
      _
    // Predicated region
    $region14: #{tpu_custom_call.1} parent=1 // pred_check
      _
    $region15: #{tpu_custom_call.1} parent=1 // pred_check_branch
      %21 = sbr.rel (0) target = $region17
    $region16: #{tpu_custom_call.1} parent=1 // pred_region
      _
    $region17: #{tpu_custom_call.1} parent=1 // pred_fallthru
      _
    // Predicated region
    $region18: #{tpu_custom_call.1} parent=1 // pred_check
      _
    $region19: #{tpu_custom_call.1} parent=1 // pred_check_branch
      %23 = sbr.rel (0) target = $region21
    $region20: #{tpu_custom_call.1} parent=1 // pred_region
      _
    $region21: #{tpu_custom_call.1} parent=1 // pred_fallthru
      _
    %v24 = vld [vmem:[%s0] sm:$0xff]
    %v25 = vld [vmem:[%s1] sm:$0xff]
    %v26 = vld [vmem:[%s1 + $0x8] sm:$0xff]
    %v27 = vld [vmem:[%s1 + $0x10] sm:$0xff]
    %v28 = vld [vmem:[%s1 + $0x18] sm:$0xff]
    %v29 = vld [vmem:[%s1 + $0x20] sm:$0xff]
    %v30 = vld [vmem:[%s1 + $0x28] sm:$0xff]
    %v31 = vld [vmem:[%s1 + $0x30] sm:$0xff]
    %v32 = vld [vmem:[%s1 + $0x38] sm:$0xff]
    %v33 = vld [vmem:[%s2] sm:$0x1]
    %v35 = vlaneseq
    %v36 = vshrl.u32 %v35, 7
    %v37 = vsub.s32 0, %v36
    %v38 = vrot.slane %v33, %v37
    %vm40 = vcmask 523264
    %v42 = vsel %vm40, %v24, 0
    %44 = vmatprep.subr.mxu0 0.0
    %45 = vmatpush1.msra.mxu0 0.0
    %46 = vmatprep.subr.mxu0 0.0
    %47 = vmatpush1.msra.mxu0 0.0
    %48 = vmatprep.subr.mxu0 0.0
    %49 = vmatpush1.msra.mxu0 0.0
    %50 = vmatprep.subr.mxu0 0.0
    %51 = vmatpush1.msra.mxu0 0.0
    %52 = vmatprep.subr.mxu0 0.0
    %53 = vmatpush1.msra.mxu0 0.0
    %54 = vmatprep.subr.mxu0 0.0
    %55 = vmatpush1.msra.mxu0 0.0
    %56 = vmatprep.subr.mxu0 0.0
    %57 = vmatpush1.msra.mxu0 0.0
    %58 = vmatprep.subr.mxu0 0.0
    %59 = vmatpush1.msra.mxu0 0.0
    %60 = vmatprep.subr.mxu0 0.0
    %61 = vmatpush1.msra.mxu0 %v32
    %62 = vmatprep.subr.mxu0 0.0
    %63 = vmatpush1.msra.mxu0 %v31
    %64 = vmatprep.subr.mxu0 0.0
    %65 = vmatpush1.msra.mxu0 %v30
    %66 = vmatprep.subr.mxu0 0.0
    %67 = vmatpush1.msra.mxu0 %v29
    %68 = vmatprep.subr.mxu0 0.0
    %69 = vmatpush1.msra.mxu0 %v28
    %70 = vmatprep.subr.mxu0 0.0
    %71 = vmatpush1.msra.mxu0 %v27
    %72 = vmatprep.subr.mxu0 0.0
    %73 = vmatpush1.msra.mxu0 %v26
    %74 = vmatprep.subr.mxu0 0.0
    %75 = vmatpush1.msra.mxu0 %v25
    %76 = vmatprep.subr.mxu0 0.0
    %77 = vmatpush2.msra.mxu0 0.0
    %78 = vmatprep.subr.mxu0 0.0
    %79 = vmatpush2.msra.mxu0 0.0
    %80 = vmatprep.subr.mxu0 0.0
    %81 = vmatpush2.msra.mxu0 0.0
    %82 = vmatprep.subr.mxu0 0.0
    %83 = vmatpush2.msra.mxu0 0.0
    %84 = vmatprep.subr.mxu0 0.0
    %85 = vmatpush2.msra.mxu0 0.0
    %86 = vmatprep.subr.mxu0 0.0
    %87 = vmatpush2.msra.mxu0 0.0
    %88 = vmatprep.subr.mxu0 0.0
    %89 = vmatpush2.msra.mxu0 0.0
    %90 = vmatprep.subr.mxu0 0.0
    %91 = vmatpush2.msra.mxu0 0.0
    %92 = vmatprep.subr.mxu0 0.0
    %93 = vmatpush2.msra.mxu0 0.0
    %94 = vmatprep.subr.mxu0 0.0
    %95 = vmatpush2.msra.mxu0 0.0
    %96 = vmatprep.subr.mxu0 0.0
    %97 = vmatpush2.msra.mxu0 0.0
    %98 = vmatprep.subr.mxu0 0.0
    %99 = vmatpush2.msra.mxu0 0.0
    %100 = vmatprep.subr.mxu0 0.0
    %101 = vmatpush2.msra.mxu0 0.0
    %102 = vmatprep.subr.mxu0 0.0
    %103 = vmatpush2.msra.mxu0 0.0
    %104 = vmatprep.subr.mxu0 0.0
    %105 = vmatpush2.msra.mxu0 0.0
    %106 = vmatprep.subr.mxu0 0.0
    %107 = vmatpush2.msra.mxu0 0.0
    %108 = vmatprep.mubr.f32.mxu0 0.0
    %109 = vmatmul.mubr.f32.gmra.mxu0 %v42
    %v110 = vpop.f32.mrf.mxu0
    %v111 = vadd.f32 %v38, %v110
    %v112 = vpop.f32.mrf.mxu0
    %113 = vdwg.mxu0
    %v114 = vmax.f32 %v111, 0.0
    %vm115 = vcmask 261120
    %116 = vst.msk [vmem:[#allocation2] sm:$0xff] %vm115, %v114
    %v117 = vld [vmem:[%s3] sm:$0xff]
    %v118 = vld [vmem:[%s3 + $0x8] sm:$0xff]
    %v119 = vld [vmem:[%s3 + $0x10] sm:$0xff]
    %v120 = vld [vmem:[%s3 + $0x18] sm:$0xff]
    %v121 = vld [vmem:[%s4] sm:$0x1]
    %v123 = vlaneseq
    %v124 = vshrl.u32 %v123, 7
    %v125 = vsub.s32 0, %v124
    %v126 = vrot.slane %v121, %v125
    %v129 = vsel %vm115, %v114, 0
    %131 = vmatprep.subr.mxu0 0.0
    %132 = vmatpush1.msra.mxu0 0.0
    %133 = vmatprep.subr.mxu0 0.0
    %134 = vmatpush1.msra.mxu0 0.0
    %135 = vmatprep.subr.mxu0 0.0
    %136 = vmatpush1.msra.mxu0 0.0
    %137 = vmatprep.subr.mxu0 0.0
    %138 = vmatpush1.msra.mxu0 0.0
    %139 = vmatprep.subr.mxu0 0.0
    %140 = vmatpush1.msra.mxu0 0.0
    %141 = vmatprep.subr.mxu0 0.0
    %142 = vmatpush1.msra.mxu0 0.0
    %143 = vmatprep.subr.mxu0 0.0
    %144 = vmatpush1.msra.mxu0 0.0
    %145 = vmatprep.subr.mxu0 0.0
    %146 = vmatpush1.msra.mxu0 0.0
    %147 = vmatprep.subr.mxu0 0.0
    %148 = vmatpush1.msra.mxu0 0.0
    %149 = vmatprep.subr.mxu0 0.0
    %150 = vmatpush1.msra.mxu0 0.0
    %151 = vmatprep.subr.mxu0 0.0
    %152 = vmatpush1.msra.mxu0 0.0
    %153 = vmatprep.subr.mxu0 0.0
    %154 = vmatpush1.msra.mxu0 0.0
    %155 = vmatprep.subr.mxu0 0.0
    %156 = vmatpush1.msra.mxu0 %v120
    %157 = vmatprep.subr.mxu0 0.0
    %158 = vmatpush1.msra.mxu0 %v119
    %159 = vmatprep.subr.mxu0 0.0
    %160 = vmatpush1.msra.mxu0 %v118
    %161 = vmatprep.subr.mxu0 0.0
    %162 = vmatpush1.msra.mxu0 %v117
    %163 = vmatprep.subr.mxu0 0.0
    %164 = vmatpush2.msra.mxu0 0.0
    %165 = vmatprep.subr.mxu0 0.0
    %166 = vmatpush2.msra.mxu0 0.0
    %167 = vmatprep.subr.mxu0 0.0
    %168 = vmatpush2.msra.mxu0 0.0
    %169 = vmatprep.subr.mxu0 0.0
    %170 = vmatpush2.msra.mxu0 0.0
    %171 = vmatprep.subr.mxu0 0.0
    %172 = vmatpush2.msra.mxu0 0.0
    %173 = vmatprep.subr.mxu0 0.0
    %174 = vmatpush2.msra.mxu0 0.0
    %175 = vmatprep.subr.mxu0 0.0
    %176 = vmatpush2.msra.mxu0 0.0
    %177 = vmatprep.subr.mxu0 0.0
    %178 = vmatpush2.msra.mxu0 0.0
    %179 = vmatprep.subr.mxu0 0.0
    %180 = vmatpush2.msra.mxu0 0.0
    %181 = vmatprep.subr.mxu0 0.0
    %182 = vmatpush2.msra.mxu0 0.0
    %183 = vmatprep.subr.mxu0 0.0
    %184 = vmatpush2.msra.mxu0 0.0
    %185 = vmatprep.subr.mxu0 0.0
    %186 = vmatpush2.msra.mxu0 0.0
    %187 = vmatprep.subr.mxu0 0.0
    %188 = vmatpush2.msra.mxu0 0.0
    %189 = vmatprep.subr.mxu0 0.0
    %190 = vmatpush2.msra.mxu0 0.0
    %191 = vmatprep.subr.mxu0 0.0
    %192 = vmatpush2.msra.mxu0 0.0
    %193 = vmatprep.subr.mxu0 0.0
    %194 = vmatpush2.msra.mxu0 0.0
    %195 = vmatprep.mubr.f32.mxu0 0.0
    %196 = vmatmul.mubr.f32.gmra.mxu0 %v129
    %v197 = vpop.f32.mrf.mxu0
    %v198 = vadd.f32 %v126, %v197
    %v199 = vpop.f32.mrf.mxu0
    %200 = vdwg.mxu0
    %v201 = vmul.f32 %v198, %v198
    %vm202 = vcmask 130048
    %v203 = vsel %vm202, %v201, 0.0
    %204 = vadd.xlane.f32.xlu0 %v203
    %v205 = vpop.xlane.xlu0 %204
    %v206 = vmax.f32 %v205, 1e-24
    %v207 = vrsqrt.pop %v206
    %v208 = vmul.f32 %v198, %v207
    %209 = vst.msk [vmem:[#allocation4] sm:$0xff] %vm202, %v208
    // Predicated region
    $region22: #{tpu_custom_call.1} parent=1 // pred_check
      _
    $region23: #{tpu_custom_call.1} parent=1 // pred_check_branch
      %211 = sbr.rel (0) target = $region25
    $region24: #{tpu_custom_call.1} parent=1 // pred_region
      %s213 = ssub.s32 128, 128
      %214 = vsyncadd [#allocation3], %s213
      %s216 = sshll.u32 [#allocation2], 4
      %s217 = int_to_ptr.vmem [resolvable:$true] %s216
      %219 = dma.vmem_to_hbm [thread:$0]  %s217, 128, %s5, [#allocation3]
    $region25: #{tpu_custom_call.1} parent=1 // pred_fallthru
      _
    // Predicated region
    $region26: #{tpu_custom_call.1} parent=1 // pred_check
      _
    $region27: #{tpu_custom_call.1} parent=1 // pred_check_branch
      %221 = sbr.rel (0) target = $region29
    $region28: #{tpu_custom_call.1} parent=1 // pred_region
      %s223 = ssub.s32 128, 128
      %224 = vsyncadd [#allocation5], %s223
      %s226 = sshll.u32 [#allocation4], 4
      %s227 = int_to_ptr.vmem [resolvable:$true] %s226
      %229 = dma.vmem_to_hbm [thread:$0]  %s227, 128, %s6, [#allocation5]
    $region29: #{tpu_custom_call.1} parent=1 // pred_fallthru
      _
    // Predicated region
    $region30: #{tpu_custom_call.1} parent=1 // pred_check
      _
    $region31: #{tpu_custom_call.1} parent=1 // pred_check_branch
      %231 = sbr.rel (0) target = $region33
    $region32: #{tpu_custom_call.1} parent=1 // pred_region
      %232 = dma.done [#allocation3], 128
    $region33: #{tpu_custom_call.1} parent=1 // pred_fallthru
      _
    // Predicated region
    $region34: #{tpu_custom_call.1} parent=1 // pred_check
      _
    $region35: #{tpu_custom_call.1} parent=1 // pred_check_branch
      %234 = sbr.rel (0) target = $region37
    $region36: #{tpu_custom_call.1} parent=1 // pred_region
      %235 = dma.done [#allocation5], 128
    $region37: #{tpu_custom_call.1} parent=1 // pred_fallthru
      _
    %236 = vsyncpa [#allocation3], 1
    %237 = vsyncpa [#allocation5], 1

</llo_original>
